<compile_context>
chip_gen: v7x
topology: tpu7x:2x2x1
jax: 0.10.0
libtpu: 0.0.40
codegen_flags: <defaults>
</compile_context>

<pallas_src>
import math

import jax
import jax.numpy as jnp
from jax.experimental import pallas as pl
from jax.experimental.pallas import tpu as pltpu


def _copy_kernel(x_ref, o_ref):
    # Pure lane-dense VMEM copy of one block.
    o_ref[...] = x_ref[...]


def _round_up(x, m):
    return ((x + m - 1) // m) * m


def _round_down(x, m):
    return (x // m) * m


def _tpu_budget():
    """Returns (per-tile byte target, vmem_limit_bytes) per TPU generation."""
    vmem = None
    try:
        info = pltpu.get_tpu_info()
        vmem = getattr(info, "vmem_capacity_bytes", None)
    except Exception:
        vmem = None
    if vmem is None:
        # Unknown chip: conservative (safe on v5e's 16 MiB scoped default
        # once we raise the limit to 32 MiB below).
        return 4 * 1024 * 1024, 32 * 1024 * 1024
    if vmem >= 96 * 1024 * 1024:
        # v5e / v6e: 128 MiB physical VMEM -> big tiles, 64 MiB scoped limit.
        return 8 * 1024 * 1024, 64 * 1024 * 1024
    # v7x: 64 MiB physical VMEM -> ~6 MiB tiles, 4 live buffers ~24 MiB.
    return 6 * 1024 * 1024, 32 * 1024 * 1024


def _largest_aligned_divisor(n, base, cap):
    """Largest divisor of n that is a multiple of `base` and <= cap (0 if none)."""
    if n % base != 0:
        return 0
    best = 0
    d = base
    while d <= min(cap, n):
        if n % d == 0:
            best = d
        d += base
    return best


def flatten_layer(x):
    """Pallas equivalent of FlattenLayer.forward: x.view(x.shape[0], -1)."""
    b = x.shape[0]
    flat = math.prod(x.shape[1:]) if x.ndim > 1 else 1
    total = b * flat
    dtype = x.dtype
    itemsize = jnp.dtype(dtype).itemsize
    # Dtype-aware sublane granularity: 8 (f32) / 16 (bf16) / 32 (int8, fp8).
    sublane = 8 * max(1, 4 // itemsize)

    tile_bytes, vmem_limit = _tpu_budget()
    bytes_accessed = 2 * total * itemsize  # read + write, pure memory traffic

    # --- Preferred path: lane-dense slab independent of (b, flat) ----------
    # View the whole contiguous buffer as (rows, F) with F a multiple of 128
    # dividing total.  Blocks cover the full width, so each DMA is a
    # contiguous HBM span and tile size is controlled purely by the row count.
    f = _largest_aligned_divisor(total, 128, 8192)
    if f > 0:
        rows = total // f
        x2 = x.reshape(rows, f)
        budget_rows = max(sublane, _round_down(tile_bytes // (f * itemsize), sublane))
        if rows <= budget_rows:
            tile_rows = rows            # single full-extent block: always legal
        else:
            tile_rows = budget_rows    # multiple of `sublane`; edge block masked
        grid = (pl.cdiv(rows, tile_rows),)
        block = (tile_rows, f)
        in_specs = [pl.BlockSpec(block, lambda i: (i, 0))]
        out_specs = pl.BlockSpec(block, lambda i: (i, 0))
        out_shape = jax.ShapeDtypeStruct((rows, f), dtype)
        dims = ("parallel",)
    # --- Fallback: total not a multiple of 128 -> masked 2-D tiling --------
    else:
        x2 = x.reshape(b, flat)
        row_cap = 32 * sublane  # 256 rows f32 / 512 bf16 / 1024 int8
        if b <= sublane:
            tile_b = b                              # full extent: always legal
        else:
            tile_b = min(row_cap, _round_down(b, sublane))
        tile_f = _round_down(max(128, tile_bytes // (max(tile_b, 1) * itemsize)), 128)
        tile_f = max(128, min(tile_f, _round_up(flat, 128)))
        # Larger tile-count axis (flat) first so v7x shards it across both TCs.
        grid = (pl.cdiv(flat, tile_f), pl.cdiv(b, tile_b))
        block = (tile_b, tile_f)
        in_specs = [pl.BlockSpec(block, lambda j, i: (i, j))]
        out_specs = pl.BlockSpec(block, lambda j, i: (i, j))
        out_shape = jax.ShapeDtypeStruct((b, flat), dtype)
        dims = ("parallel", "parallel")

    y = pl.pallas_call(
        _copy_kernel,
        out_shape=out_shape,
        grid=grid,
        in_specs=in_specs,
        out_specs=out_specs,
        compiler_params=pltpu.CompilerParams(
            dimension_semantics=dims,
            vmem_limit_bytes=vmem_limit,
        ),
        cost_estimate=pl.CostEstimate(
            flops=0, transcendentals=0, bytes_accessed=bytes_accessed
        ),
    )(x2)

    # Free, metadata-only reshape back to the module's output shape.
    return y.reshape(b, flat)


if __name__ == "__main__":
    key = jax.random.PRNGKey(0)
    # Small NCHW input consistent with the module's typical use.
    x = jax.random.normal(key, (2, 4, 16, 16), dtype=jnp.float32)

    y = flatten_layer(x)
    jax.block_until_ready(y)

    # Correctness check against the pure-JAX reference (x.view(B, -1)).
    ref = x.reshape(x.shape[0], -1)
    assert y.shape == ref.shape, (y.shape, ref.shape)
    assert jnp.array_equal(y, ref), "flatten mismatch"

    print("KERNEL_OK")
</pallas_src>

<mosaic_0001>
module attributes {stable_mosaic.version = 11 : i64} {
  func.func @_copy_kernel(%arg0: i32, %arg1: memref<1x2048xf32, #tpu.memory_space<vmem>>, %arg2: memref<1x2048xf32, #tpu.memory_space<vmem>>) attributes {dimension_semantics = [#tpu.dimension_semantics<parallel>], iteration_bounds = array<i64: 1>, scalar_prefetch = 0 : i64, scratch_operands = 0 : i64, tpu.core_type = #tpu.core_type<tc>, window_params = [{transform_indices = @transform_0, window_bounds = array<i64: 1, 2048>}, {transform_indices = @transform_1, window_bounds = array<i64: 1, 2048>}]} {
    %c0 = arith.constant 0 : index
    %c0_0 = arith.constant 0 : index
    %0 = vector.load %arg1[%c0, %c0_0] : memref<1x2048xf32, #tpu.memory_space<vmem>>, vector<1x2048xf32>
    %c0_1 = arith.constant 0 : index
    %c0_2 = arith.constant 0 : index
    %1 = vector.load %arg2[%c0_1, %c0_2] : memref<1x2048xf32, #tpu.memory_space<vmem>>, vector<1x2048xf32>
    tpu.vector_store %arg2[%c0_1, %c0_2], %0 {strides = array<i32>} : memref<1x2048xf32, #tpu.memory_space<vmem>>, vector<1x2048xf32>,
    return
  }
  func.func @transform_0(%arg0: i32) -> (i32, i32) {
    %c0_i32 = arith.constant 0 : i32
    %c0_i32_0 = arith.constant 0 : i32
    return %arg0, %c0_i32 : i32, i32
  }
  func.func @transform_1(%arg0: i32) -> (i32, i32) {
    %c0_i32 = arith.constant 0 : i32
    %c0_i32_0 = arith.constant 0 : i32
    return %arg0, %c0_i32 : i32, i32
  }
}

</mosaic_0001>

<llo_original>
// kernel: tpu_custom_call.1
$region0: #{tpu_custom_call.1}
  #allocation0 [shape = 'u32[]', space=smem, size = 0x4, offset = 0x4, fixed_abs, tag = 'smem constant byte address 0x4 - core index']
  #allocation1 [shape = 'u32[144,128]{1,0:T(1,128)}', space=vmem, size = 0x12000, scoped, tag = 'internal scratch']
  %s0 = inlined_call_operand.hbm [shape: f32[1,2048], index: 0, kind: input, shape index: {}]
  %s1 = inlined_call_operand.hbm [shape: f32[1,2048], index: 1, kind: output, shape index: {}]
  %s2 = sld [smem:[#allocation0]]
  $region18: #{tpu_custom_call.1} parent=0
    _
  %s4 = ssub.s32 1, %s2
  %s5 = scalar_select 0, %s4, %s2
  $region1: #{tpu_custom_call.1} parent=0
    #allocation2 [shape = 'u8[8192]{0}', space=vmem, size = 0x2000, scoped, tag = 'input window, operand 0, single buffered']
    #allocation3 [shape = 's32[1]{0}', space=sflag, size = 0x4, scoped, tag = 'scoped memory for tpu_custom_call.1']
    #allocation4 [shape = 's32[1]{0}', space=sflag, size = 0x4, scoped, tag = 'scoped memory for tpu_custom_call.1']
    #allocation5 [shape = 'u8[8192]{0}', space=vmem, size = 0x2000, scoped, tag = 'output window, operand 0, single buffered']
    %6 = vsyncpa [#allocation3], 0
    %7 = vsyncpa [#allocation4], 0
    // Predicated region
    $region2: #{tpu_custom_call.1} parent=1 // pred_check
      _
    $region3: #{tpu_custom_call.1} parent=1 // pred_check_branch
      %9 = sbr.rel (0) target = $region5
    $region4: #{tpu_custom_call.1} parent=1 // pred_region
      %s11 = ssub.s32 256, 256
      %12 = vsyncadd [#allocation3], %s11
      %s14 = sshll.u32 [#allocation2], 4
      %s15 = int_to_ptr.vmem [resolvable:$true] %s14
      %17 = dma.hbm_to_vmem [thread:$0]  %s0, 256, %s15, [#allocation3]
    $region5: #{tpu_custom_call.1} parent=1 // pred_fallthru
      _
    // Predicated region
    $region6: #{tpu_custom_call.1} parent=1 // pred_check
      _
    $region7: #{tpu_custom_call.1} parent=1 // pred_check_branch
      %19 = sbr.rel (0) target = $region9
    $region8: #{tpu_custom_call.1} parent=1 // pred_region
      %20 = dma.done [#allocation3], 256
    $region9: #{tpu_custom_call.1} parent=1 // pred_fallthru
      _
    %v21 = vld [vmem:[#allocation2] sm:$0xff]
    %v22 = vld [vmem:[#allocation2 + $0x8] sm:$0xff]
    %23 = vst [vmem:[#allocation5] sm:$0xff] %v21
    %24 = vst [vmem:[#allocation5 + $0x8] sm:$0xff] %v22
    // Predicated region
    $region10: #{tpu_custom_call.1} parent=1 // pred_check
      _
    $region11: #{tpu_custom_call.1} parent=1 // pred_check_branch
      %26 = sbr.rel (0) target = $region13
    $region12: #{tpu_custom_call.1} parent=1 // pred_region
      %s28 = ssub.s32 256, 256
      %29 = vsyncadd [#allocation4], %s28
      %s31 = sshll.u32 [#allocation5], 4
      %s32 = int_to_ptr.vmem [resolvable:$true] %s31
      %34 = dma.vmem_to_hbm [thread:$0]  %s32, 256, %s1, [#allocation4]
    $region13: #{tpu_custom_call.1} parent=1 // pred_fallthru
      _
    // Predicated region
    $region14: #{tpu_custom_call.1} parent=1 // pred_check
      _
    $region15: #{tpu_custom_call.1} parent=1 // pred_check_branch
      %36 = sbr.rel (0) target = $region17
    $region16: #{tpu_custom_call.1} parent=1 // pred_region
      %37 = dma.done [#allocation4], 256
    $region17: #{tpu_custom_call.1} parent=1 // pred_fallthru
      _
    %38 = vsyncpa [#allocation3], 1
    %39 = vsyncpa [#allocation4], 1

</llo_original>
